<compile_context>
chip_gen: v7x
topology: tpu7x:2x2x1
jax: 0.10.0
libtpu: 0.0.40
codegen_flags: <defaults>
</compile_context>

<pallas_src>
import functools

import jax
import jax.numpy as jnp
from jax import lax
from jax.experimental import pallas as pl
from jax.experimental.pallas import tpu as pltpu


def _round_up(x, m):
    return (x + m - 1) // m * m


def _pick_bblk(B):
    """Largest per-step sample batch that keeps >= 2 grid steps (so both v7x
    TensorCores get work; v5e/v6e have a single TC and don't care)."""
    best = B
    for blk in range(1, B + 1):
        if B % blk == 0 and B // blk >= 2:
            best = blk
    return best


def _silu(z):
    # sigmoid(z) = 0.5 * (1 + tanh(z/2)): one EUP pass per element instead of
    # exp + reciprocal (two), and no overflow for very negative z.
    return z * (0.5 * jnp.tanh(0.5 * z) + 0.5)


def _row_shift(y, delta, H):
    """y: (M, L) with samples stacked in blocks of H rows.
    Returns z with z[r] = y[r + delta] inside each sample and 0 at the halo
    rows (sample boundaries).  Uses an XLU sublane roll + a VALU select, so no
    misaligned slices / sublane concats and no scratch round trip."""
    M = y.shape[0]
    rolled = pltpu.roll(y, shift=(-delta) % M, axis=0)
    r = lax.broadcasted_iota(jnp.int32, y.shape, 0)
    if delta < 0:
        halo = (r % H) < (-delta)
    else:
        halo = (r % H) >= (H - delta)
    return jnp.where(halo, jnp.zeros_like(y), rolled)


def _myblock_kernel(x_ref, g_ref, beta_ref, w1_ref, b1_ref, w2_ref, b2_ref,
                    o_ref, *, bblk, H, n_norm, eps):
    # x_ref:    (bblk, H, Kin)   flat NHWC rows, zero lane padding (f32)
    # g_ref:    (H, Kin)         LayerNorm gamma (flat HWC, zero-padded lanes)
    # beta_ref: (H, Kin)         LayerNorm beta
    # w1_ref:   (3*Kin, Kout)    conv1 banded weights, dy folded into K (bf16)
    # b1_ref:   (1, Kout)        conv1 bias tiled across W (f32)
    # w2_ref:   (3*Kout, Kout)   conv2 banded weights (bf16)
    # b2_ref:   (1, Kout)        conv2 bias (f32)
    # o_ref:    (bblk, H, Kout)  lane-dense output (f32)
    Kin = x_ref.shape[-1]
    Kout = o_ref.shape[-1]
    M = bblk * H

    # ---- LayerNorm over (C,H,W) per sample: single-pass sum / sum-of-squares.
    # Padded lanes are zero and gamma/beta there are zero, so they contribute
    # nothing; the divisor is the real element count n_norm.
    x = x_ref[...]                                            # (bblk, H, Kin)
    inv_n = 1.0 / float(n_norm)
    s = jnp.sum(x, axis=(1, 2), keepdims=True)
    ss = jnp.sum(x * x, axis=(1, 2), keepdims=True)
    mean = s * inv_n
    var = ss * inv_n - mean * mean
    rstd = lax.rsqrt(var + eps)
    xn = ((x - mean) * rstd) * g_ref[...] + beta_ref[...]     # (bblk, H, Kin)
    xn = xn.reshape(M, Kin)                                   # samples stacked in M

    # ---- conv1: single bf16 matmul, 3 dy taps concatenated along K ----
    op1 = jnp.concatenate(
        [_row_shift(xn, -1, H), xn, _row_shift(xn, 1, H)],
        axis=-1).astype(jnp.bfloat16)                         # (M, 3*Kin)
    h1 = jnp.dot(op1, w1_ref[...], preferred_element_type=jnp.float32)
    a1 = _silu(h1 + b1_ref[...])                              # (M, Kout) f32

    # ---- conv2: same trick on SiLU(conv1) ----
    op2 = jnp.concatenate(
        [_row_shift(a1, -1, H), a1, _row_shift(a1, 1, H)],
        axis=-1).astype(jnp.bfloat16)                         # (M, 3*Kout)
    h2 = jnp.dot(op2, w2_ref[...], preferred_element_type=jnp.float32)
    a2 = _silu(h2 + b2_ref[...])                              # (M, Kout)

    o_ref[...] = a2.reshape(bblk, H, Kout).astype(o_ref.dtype)


def _conv3x3_band_kcat(w_hwio, W, k_pad, n_pad):
    """Fold a 3x3 'same' conv into one (3*k_pad, n_pad) matrix for the flat
    (row, W*C) layout.  The 3 dx taps and the W-direction zero padding live in
    the band structure; the 3 dy taps are concatenated along K (dy-major) to
    match the kernel operand [in[h-1] | in[h] | in[h+1]]."""
    KH, KW, Ci, Co = w_hwio.shape
    assert KH == 3 and KW == 3
    blocks = []
    for dy in range(KH):
        m = jnp.zeros((W, Ci, W, Co), jnp.float32)
        for dx in range(KW):
            # shift[x_in, x_out] = 1 iff x_in == x_out + dx - 1
            shift = jnp.eye(W, W, k=1 - dx, dtype=jnp.float32)
            m = m + jnp.einsum('ab,io->aibo', shift,
                               w_hwio[dy, dx].astype(jnp.float32))
        m = m.reshape(W * Ci, W * Co)
        m = jnp.pad(m, ((0, k_pad - W * Ci), (0, n_pad - W * Co)))
        blocks.append(m)
    return jnp.concatenate(blocks, axis=0)


def make_myblock(gamma_chw, beta_chw, w1, b1, w2, b2, *, eps=1e-5, bblk=None):
    """Builds the fused MyBlock forward.  All parameter / layout transforms are
    done ONCE here and closed over as constants (hoisted out of the hot path).
    TODO(synk): config.act is unknown in the spec; SiLU is assumed."""
    Cin, H, W = gamma_chw.shape
    Cout = w1.shape[-1]
    WCin, WCout = W * Cin, W * Cout
    # Lane-pad the flat W*C axes to multiples of 128: every matmul operand, the
    # K-concat and the output store stay lane-aligned / lane-dense, and v5e
    # gets fully packed 128-deep K passes.
    Kin = _round_up(WCin, 128)
    Kout = _round_up(WCout, 128)

    def flat_pad(p_chw):  # (C,H,W) -> (H, Kin) with zero lane padding
        p = jnp.transpose(p_chw.astype(jnp.float32), (1, 2, 0)).reshape(H, WCin)
        return jnp.pad(p, ((0, 0), (0, Kin - WCin)))

    g_flat = flat_pad(gamma_chw)
    bt_flat = flat_pad(beta_chw)
    w1_k = _conv3x3_band_kcat(w1, W, Kin, Kout).astype(jnp.bfloat16)   # (3*Kin, Kout)
    w2_k = _conv3x3_band_kcat(w2, W, Kout, Kout).astype(jnp.bfloat16)  # (3*Kout, Kout)
    b1_t = jnp.pad(jnp.tile(b1.astype(jnp.float32), (W,)),
                   (0, Kout - WCout)).reshape(1, Kout)
    b2_t = jnp.pad(jnp.tile(b2.astype(jnp.float32), (W,)),
                   (0, Kout - WCout)).reshape(1, Kout)

    def forward(x_nchw):
        B = x_nchw.shape[0]
        blk = bblk if bblk is not None else _pick_bblk(B)
        if B % blk != 0:
            blk = 1
        steps = B // blk

        # Layout plumbing: NCHW -> flat lane-padded (B, H, Kin).
        # TODO(synk): in a real model keep activations in this flat layout
        # across blocks instead of transposing around every call.
        x_flat = jnp.transpose(x_nchw.astype(jnp.float32), (0, 2, 3, 1))
        x_flat = x_flat.reshape(B, H, WCin)
        x_flat = jnp.pad(x_flat, ((0, 0), (0, 0), (0, Kin - WCin)))

        kernel = functools.partial(_myblock_kernel, bblk=blk, H=H,
                                   n_norm=Cin * H * W, eps=eps)

        out_flat = pl.pallas_call(
            kernel,
            out_shape=jax.ShapeDtypeStruct((B, H, Kout), jnp.float32),
            grid_spec=pltpu.PrefetchScalarGridSpec(
                num_scalar_prefetch=0,
                grid=(steps,),
                in_specs=[
                    pl.BlockSpec((blk, H, Kin), lambda i: (i, 0, 0)),
                    pl.BlockSpec((H, Kin), lambda i: (0, 0)),
                    pl.BlockSpec((H, Kin), lambda i: (0, 0)),
                    pl.BlockSpec((3 * Kin, Kout), lambda i: (0, 0)),
                    pl.BlockSpec((1, Kout), lambda i: (0, 0)),
                    pl.BlockSpec((3 * Kout, Kout), lambda i: (0, 0)),
                    pl.BlockSpec((1, Kout), lambda i: (0, 0)),
                ],
                out_specs=pl.BlockSpec((blk, H, Kout), lambda i: (i, 0, 0)),
            ),
            compiler_params=pltpu.CompilerParams(
                dimension_semantics=("parallel",)),
        )(x_flat, g_flat, bt_flat, w1_k, b1_t, w2_k, b2_t)

        out = out_flat[..., :WCout].reshape(B, H, W, Cout)
        return jnp.transpose(out, (0, 3, 1, 2))               # back to NCHW

    return jax.jit(forward)


def _reference_forward(x, gamma, beta, w1, b1, w2, b2, eps=1e-5):
    """Pure-JAX f32 reference matching the PyTorch module (NCHW)."""
    mean = x.mean(axis=(1, 2, 3), keepdims=True)
    var = ((x - mean) ** 2).mean(axis=(1, 2, 3), keepdims=True)
    xn = (x - mean) / jnp.sqrt(var + eps) * gamma[None] + beta[None]

    def conv(inp, w, b):
        out = lax.conv_general_dilated(
            inp, w, window_strides=(1, 1), padding=((1, 1), (1, 1)),
            dimension_numbers=("NCHW", "HWIO", "NCHW"))
        return out + b[None, :, None, None]

    def silu(z):
        return z * jax.nn.sigmoid(z)

    h = silu(conv(xn, w1, b1))
    return silu(conv(h, w2, b2))


if __name__ == "__main__":
    B, Cin, Cout, H, W = 2, 4, 8, 16, 16

    key = jax.random.PRNGKey(0)
    kx, kg, kb, kw1, kb1, kw2, kb2 = jax.random.split(key, 7)

    x = jax.random.normal(kx, (B, Cin, H, W), dtype=jnp.float32)

    # LayerNorm affine params, shape=(Cin, H, W); perturbed from the PyTorch
    # default so the affine path is actually exercised.
    gamma = 1.0 + 0.1 * jax.random.normal(kg, (Cin, H, W), dtype=jnp.float32)
    beta = 0.1 * jax.random.normal(kb, (Cin, H, W), dtype=jnp.float32)

    # Conv params stored as HWIO (KH, KW, Cin, Cout) / (Cout,).
    w1 = 0.1 * jax.random.normal(kw1, (3, 3, Cin, Cout), dtype=jnp.float32)
    b1 = 0.1 * jax.random.normal(kb1, (Cout,), dtype=jnp.float32)
    w2 = 0.1 * jax.random.normal(kw2, (3, 3, Cout, Cout), dtype=jnp.float32)
    b2 = 0.1 * jax.random.normal(kb2, (Cout,), dtype=jnp.float32)

    fwd = make_myblock(gamma, beta, w1, b1, w2, b2)
    out = jax.block_until_ready(fwd(x))

    ref = _reference_forward(x, gamma, beta, w1, b1, w2, b2)
    assert out.shape == (B, Cout, H, W)
    # bf16 MXU operands vs an f32 reference -> loosened tolerance.
    assert jnp.allclose(out, ref, atol=5e-2, rtol=5e-2), "mismatch vs reference"

    print("KERNEL_OK")
</pallas_src>

<mosaic_0001>
module attributes {stable_mosaic.version = 11 : i64} {
  func.func @_myblock_kernel(%arg0: i32, %arg1: memref<1x16x128xf32, #tpu.memory_space<vmem>>, %arg2: memref<16x128xf32, #tpu.memory_space<vmem>>, %arg3: memref<16x128xf32, #tpu.memory_space<vmem>>, %arg4: memref<384x128xbf16, #tpu.memory_space<vmem>>, %arg5: memref<1x128xf32, #tpu.memory_space<vmem>>, %arg6: memref<384x128xbf16, #tpu.memory_space<vmem>>, %arg7: memref<1x128xf32, #tpu.memory_space<vmem>>, %arg8: memref<1x16x128xf32, #tpu.memory_space<vmem>>) attributes {dimension_semantics = [#tpu.dimension_semantics<parallel>], iteration_bounds = array<i64: 2>, scalar_prefetch = 0 : i64, scratch_operands = 0 : i64, tpu.core_type = #tpu.core_type<tc>, window_params = [{transform_indices = @transform_0, window_bounds = array<i64: 1, 16, 128>}, {pipeline_mode = #tpu.pipeline_mode<synchronous>, transform_indices = @transform_1, window_bounds = array<i64: 16, 128>}, {pipeline_mode = #tpu.pipeline_mode<synchronous>, transform_indices = @transform_2, window_bounds = array<i64: 16, 128>}, {pipeline_mode = #tpu.pipeline_mode<synchronous>, transform_indices = @transform_3, window_bounds = array<i64: 384, 128>}, {pipeline_mode = #tpu.pipeline_mode<synchronous>, transform_indices = @transform_4, window_bounds = array<i64: 1, 128>}, {pipeline_mode = #tpu.pipeline_mode<synchronous>, transform_indices = @transform_5, window_bounds = array<i64: 384, 128>}, {pipeline_mode = #tpu.pipeline_mode<synchronous>, transform_indices = @transform_6, window_bounds = array<i64: 1, 128>}, {transform_indices = @transform_7, window_bounds = array<i64: 1, 16, 128>}]} {
    %c0 = arith.constant 0 : index
    %c0_0 = arith.constant 0 : index
    %c0_1 = arith.constant 0 : index
    %0 = vector.load %arg1[%c0, %c0_0, %c0_1] : memref<1x16x128xf32, #tpu.memory_space<vmem>>, vector<1x16x128xf32>
    %cst = arith.constant dense<0.000000e+00> : vector<1xf32>
    %1 = vector.multi_reduction <add>, %0, %cst [1, 2] : vector<1x16x128xf32> to vector<1xf32>
    %2 = vector.shape_cast %1 : vector<1xf32> to vector<1x1x1xf32>
    %3 = arith.mulf %0, %0 : vector<1x16x128xf32>
    %cst_2 = arith.constant dense<0.000000e+00> : vector<1xf32>
    %4 = vector.multi_reduction <add>, %3, %cst_2 [1, 2] : vector<1x16x128xf32> to vector<1xf32>
    %5 = vector.shape_cast %4 : vector<1xf32> to vector<1x1x1xf32>
    %cst_3 = arith.constant 9.765625E-4 : f32
    %6 = vector.broadcast %cst_3 : f32 to vector<1x1x1xf32>
    %7 = arith.mulf %2, %6 : vector<1x1x1xf32>
    %cst_4 = arith.constant 9.765625E-4 : f32
    %8 = vector.broadcast %cst_4 : f32 to vector<1x1x1xf32>
    %9 = arith.mulf %5, %8 : vector<1x1x1xf32>
    %10 = arith.mulf %7, %7 : vector<1x1x1xf32>
    %11 = arith.subf %9, %10 : vector<1x1x1xf32>
    %cst_5 = arith.constant 9.99999974E-6 : f32
    %12 = vector.broadcast %cst_5 : f32 to vector<1x1x1xf32>
    %13 = arith.addf %11, %12 : vector<1x1x1xf32>
    %14 = math.rsqrt %13 : vector<1x1x1xf32>
    %15 = vector.broadcast %7 : vector<1x1x1xf32> to vector<1x16x128xf32>
    %16 = arith.subf %0, %15 : vector<1x16x128xf32>
    %17 = vector.broadcast %14 : vector<1x1x1xf32> to vector<1x16x128xf32>
    %18 = arith.mulf %16, %17 : vector<1x16x128xf32>
    %c0_6 = arith.constant 0 : index
    %c0_7 = arith.constant 0 : index
    %19 = vector.load %arg2[%c0_6, %c0_7] : memref<16x128xf32, #tpu.memory_space<vmem>>, vector<16x128xf32>
    %20 = vector.shape_cast %19 : vector<16x128xf32> to vector<1x16x128xf32>
    %21 = arith.mulf %18, %20 : vector<1x16x128xf32>
    %c0_8 = arith.constant 0 : index
    %c0_9 = arith.constant 0 : index
    %22 = vector.load %arg3[%c0_8, %c0_9] : memref<16x128xf32, #tpu.memory_space<vmem>>, vector<16x128xf32>
    %23 = vector.shape_cast %22 : vector<16x128xf32> to vector<1x16x128xf32>
    %24 = arith.addf %21, %23 : vector<1x16x128xf32>
    %25 = vector.shape_cast %24 : vector<1x16x128xf32> to vector<16x128xf32>
    %c1_i32 = arith.constant 1 : i32
    %26 = tpu.dynamic_rotate %25 by %c1_i32 dim 0 : vector<16x128xf32>, i32 -> vector<16x128xf32>
    %27 = tpu.iota {dimensions = array<i32: 0>} : vector<16x128xi32>
    %c16_i32 = arith.constant 16 : i32
    %c0_i32 = arith.constant 0 : i32
    %28 = arith.cmpi eq, %c16_i32, %c0_i32 : i32
    %c1_i32_10 = arith.constant 1 : i32
    %29 = arith.select %28, %c1_i32_10, %c16_i32 : i32
    %30 = vector.broadcast %29 : i32 to vector<16x128xi32>
    %31 = arith.remsi %27, %30 : vector<16x128xi32>
    %c0_i32_11 = arith.constant 0 : i32
    %32 = vector.broadcast %c0_i32_11 : i32 to vector<16x128xi32>
    %33 = arith.cmpi ne, %31, %32 : vector<16x128xi32>
    %c0_i32_12 = arith.constant 0 : i32
    %34 = vector.broadcast %c0_i32_12 : i32 to vector<16x128xi32>
    %35 = arith.cmpi slt, %31, %34 : vector<16x128xi32>
    %c0_i32_13 = arith.constant 0 : i32
    %36 = arith.cmpi slt, %29, %c0_i32_13 : i32
    %37 = vector.broadcast %36 : i1 to vector<16x128xi1>
    %38 = vector.broadcast %37 : vector<16x128xi1> to vector<16x128xi1>
    %39 = arith.xori %35, %38 : vector<16x128xi1>
    %40 = arith.andi %39, %33 : vector<16x128xi1>
    %41 = vector.broadcast %29 : i32 to vector<16x128xi32>
    %42 = arith.addi %31, %41 : vector<16x128xi32>
    %43 = arith.select %40, %42, %31 : vector<16x128xi1>, vector<16x128xi32>
    %c1_i32_14 = arith.constant 1 : i32
    %44 = vector.broadcast %c1_i32_14 : i32 to vector<16x128xi32>
    %45 = arith.cmpi slt, %43, %44 : vector<16x128xi32>
    %cst_15 = arith.constant 0.000000e+00 : f32
    %46 = vector.broadcast %cst_15 : f32 to vector<16x128xf32>
    %47 = arith.select %45, %46, %26 : vector<16x128xi1>, vector<16x128xf32>
    %c15_i32 = arith.constant 15 : i32
    %48 = tpu.dynamic_rotate %25 by %c15_i32 dim 0 : vector<16x128xf32>, i32 -> vector<16x128xf32>
    %49 = tpu.iota {dimensions = array<i32: 0>} : vector<16x128xi32>
    %c16_i32_16 = arith.constant 16 : i32
    %c0_i32_17 = arith.constant 0 : i32
    %50 = arith.cmpi eq, %c16_i32_16, %c0_i32_17 : i32
    %c1_i32_18 = arith.constant 1 : i32
    %51 = arith.select %50, %c1_i32_18, %c16_i32_16 : i32
    %52 = vector.broadcast %51 : i32 to vector<16x128xi32>
    %53 = arith.remsi %49, %52 : vector<16x128xi32>
    %c0_i32_19 = arith.constant 0 : i32
    %54 = vector.broadcast %c0_i32_19 : i32 to vector<16x128xi32>
    %55 = arith.cmpi ne, %53, %54 : vector<16x128xi32>
    %c0_i32_20 = arith.constant 0 : i32
    %56 = vector.broadcast %c0_i32_20 : i32 to vector<16x128xi32>
    %57 = arith.cmpi slt, %53, %56 : vector<16x128xi32>
    %c0_i32_21 = arith.constant 0 : i32
    %58 = arith.cmpi slt, %51, %c0_i32_21 : i32
    %59 = vector.broadcast %58 : i1 to vector<16x128xi1>
    %60 = vector.broadcast %59 : vector<16x128xi1> to vector<16x128xi1>
    %61 = arith.xori %57, %60 : vector<16x128xi1>
    %62 = arith.andi %61, %55 : vector<16x128xi1>
    %63 = vector.broadcast %51 : i32 to vector<16x128xi32>
    %64 = arith.addi %53, %63 : vector<16x128xi32>
    %65 = arith.select %62, %64, %53 : vector<16x128xi1>, vector<16x128xi32>
    %c15_i32_22 = arith.constant 15 : i32
    %66 = vector.broadcast %c15_i32_22 : i32 to vector<16x128xi32>
    %67 = arith.cmpi sge, %65, %66 : vector<16x128xi32>
    %cst_23 = arith.constant 0.000000e+00 : f32
    %68 = vector.broadcast %cst_23 : f32 to vector<16x128xf32>
    %69 = arith.select %67, %68, %48 : vector<16x128xi1>, vector<16x128xf32>
    %70 = tpu.concatenate %47, %25, %69 in 1 : vector<16x128xf32>, vector<16x128xf32>, vector<16x128xf32> -> vector<16x384xf32>
    %71 = arith.truncf %70 : vector<16x384xf32> to vector<16x384xbf16>
    %c0_24 = arith.constant 0 : index
    %c0_25 = arith.constant 0 : index
    %72 = vector.load %arg4[%c0_24, %c0_25] : memref<384x128xbf16, #tpu.memory_space<vmem>>, vector<384x128xbf16>
    %cst_26 = arith.constant dense<0.000000e+00> : vector<16x128xf32>
    %73 = tpu.matmul %71, %72, %cst_26 {dimension_numbers = #tpu.dot_dimension_numbers<[1], [0], [0], [1], [0, 0, 1, 1], [], []>} : vector<16x384xbf16>, vector<384x128xbf16>, vector<16x128xf32> -> vector<16x128xf32>
    %c0_27 = arith.constant 0 : index
    %c0_28 = arith.constant 0 : index
    %74 = vector.load %arg5[%c0_27, %c0_28] : memref<1x128xf32, #tpu.memory_space<vmem>>, vector<1x128xf32>
    %75 = vector.broadcast %74 : vector<1x128xf32> to vector<16x128xf32>
    %76 = arith.addf %73, %75 : vector<16x128xf32>
    %cst_29 = arith.constant 5.000000e-01 : f32
    %77 = vector.broadcast %cst_29 : f32 to vector<16x128xf32>
    %78 = arith.mulf %77, %76 : vector<16x128xf32>
    %79 = math.tanh %78 : vector<16x128xf32>
    %cst_30 = arith.constant 5.000000e-01 : f32
    %80 = vector.broadcast %cst_30 : f32 to vector<16x128xf32>
    %81 = arith.mulf %80, %79 : vector<16x128xf32>
    %cst_31 = arith.constant 5.000000e-01 : f32
    %82 = vector.broadcast %cst_31 : f32 to vector<16x128xf32>
    %83 = arith.addf %81, %82 : vector<16x128xf32>
    %84 = arith.mulf %76, %83 : vector<16x128xf32>
    %c1_i32_32 = arith.constant 1 : i32
    %85 = tpu.dynamic_rotate %84 by %c1_i32_32 dim 0 : vector<16x128xf32>, i32 -> vector<16x128xf32>
    %86 = tpu.iota {dimensions = array<i32: 0>} : vector<16x128xi32>
    %c16_i32_33 = arith.constant 16 : i32
    %c0_i32_34 = arith.constant 0 : i32
    %87 = arith.cmpi eq, %c16_i32_33, %c0_i32_34 : i32
    %c1_i32_35 = arith.constant 1 : i32
    %88 = arith.select %87, %c1_i32_35, %c16_i32_33 : i32
    %89 = vector.broadcast %88 : i32 to vector<16x128xi32>
    %90 = arith.remsi %86, %89 : vector<16x128xi32>
    %c0_i32_36 = arith.constant 0 : i32
    %91 = vector.broadcast %c0_i32_36 : i32 to vector<16x128xi32>
    %92 = arith.cmpi ne, %90, %91 : vector<16x128xi32>
    %c0_i32_37 = arith.constant 0 : i32
    %93 = vector.broadcast %c0_i32_37 : i32 to vector<16x128xi32>
    %94 = arith.cmpi slt, %90, %93 : vector<16x128xi32>
    %c0_i32_38 = arith.constant 0 : i32
    %95 = arith.cmpi slt, %88, %c0_i32_38 : i32
    %96 = vector.broadcast %95 : i1 to vector<16x128xi1>
    %97 = vector.broadcast %96 : vector<16x128xi1> to vector<16x128xi1>
    %98 = arith.xori %94, %97 : vector<16x128xi1>
    %99 = arith.andi %98, %92 : vector<16x128xi1>
    %100 = vector.broadcast %88 : i32 to vector<16x128xi32>
    %101 = arith.addi %90, %100 : vector<16x128xi32>
    %102 = arith.select %99, %101, %90 : vector<16x128xi1>, vector<16x128xi32>
    %c1_i32_39 = arith.constant 1 : i32
    %103 = vector.broadcast %c1_i32_39 : i32 to vector<16x128xi32>
    %104 = arith.cmpi slt, %102, %103 : vector<16x128xi32>
    %cst_40 = arith.constant 0.000000e+00 : f32
    %105 = vector.broadcast %cst_40 : f32 to vector<16x128xf32>
    %106 = arith.select %104, %105, %85 : vector<16x128xi1>, vector<16x128xf32>
    %c15_i32_41 = arith.constant 15 : i32
    %107 = tpu.dynamic_rotate %84 by %c15_i32_41 dim 0 : vector<16x128xf32>, i32 -> vector<16x128xf32>
    %108 = tpu.iota {dimensions = array<i32: 0>} : vector<16x128xi32>
    %c16_i32_42 = arith.constant 16 : i32
    %c0_i32_43 = arith.constant 0 : i32
    %109 = arith.cmpi eq, %c16_i32_42, %c0_i32_43 : i32
    %c1_i32_44 = arith.constant 1 : i32
    %110 = arith.select %109, %c1_i32_44, %c16_i32_42 : i32
    %111 = vector.broadcast %110 : i32 to vector<16x128xi32>
    %112 = arith.remsi %108, %111 : vector<16x128xi32>
    %c0_i32_45 = arith.constant 0 : i32
    %113 = vector.broadcast %c0_i32_45 : i32 to vector<16x128xi32>
    %114 = arith.cmpi ne, %112, %113 : vector<16x128xi32>
    %c0_i32_46 = arith.constant 0 : i32
    %115 = vector.broadcast %c0_i32_46 : i32 to vector<16x128xi32>
    %116 = arith.cmpi slt, %112, %115 : vector<16x128xi32>
    %c0_i32_47 = arith.constant 0 : i32
    %117 = arith.cmpi slt, %110, %c0_i32_47 : i32
    %118 = vector.broadcast %117 : i1 to vector<16x128xi1>
    %119 = vector.broadcast %118 : vector<16x128xi1> to vector<16x128xi1>
    %120 = arith.xori %116, %119 : vector<16x128xi1>
    %121 = arith.andi %120, %114 : vector<16x128xi1>
    %122 = vector.broadcast %110 : i32 to vector<16x128xi32>
    %123 = arith.addi %112, %122 : vector<16x128xi32>
    %124 = arith.select %121, %123, %112 : vector<16x128xi1>, vector<16x128xi32>
    %c15_i32_48 = arith.constant 15 : i32
    %125 = vector.broadcast %c15_i32_48 : i32 to vector<16x128xi32>
    %126 = arith.cmpi sge, %124, %125 : vector<16x128xi32>
    %cst_49 = arith.constant 0.000000e+00 : f32
    %127 = vector.broadcast %cst_49 : f32 to vector<16x128xf32>
    %128 = arith.select %126, %127, %107 : vector<16x128xi1>, vector<16x128xf32>
    %129 = tpu.concatenate %106, %84, %128 in 1 : vector<16x128xf32>, vector<16x128xf32>, vector<16x128xf32> -> vector<16x384xf32>
    %130 = arith.truncf %129 : vector<16x384xf32> to vector<16x384xbf16>
    %c0_50 = arith.constant 0 : index
    %c0_51 = arith.constant 0 : index
    %131 = vector.load %arg6[%c0_50, %c0_51] : memref<384x128xbf16, #tpu.memory_space<vmem>>, vector<384x128xbf16>
    %cst_52 = arith.constant dense<0.000000e+00> : vector<16x128xf32>
    %132 = tpu.matmul %130, %131, %cst_52 {dimension_numbers = #tpu.dot_dimension_numbers<[1], [0], [0], [1], [0, 0, 1, 1], [], []>} : vector<16x384xbf16>, vector<384x128xbf16>, vector<16x128xf32> -> vector<16x128xf32>
    %c0_53 = arith.constant 0 : index
    %c0_54 = arith.constant 0 : index
    %133 = vector.load %arg7[%c0_53, %c0_54] : memref<1x128xf32, #tpu.memory_space<vmem>>, vector<1x128xf32>
    %134 = vector.broadcast %133 : vector<1x128xf32> to vector<16x128xf32>
    %135 = arith.addf %132, %134 : vector<16x128xf32>
    %cst_55 = arith.constant 5.000000e-01 : f32
    %136 = vector.broadcast %cst_55 : f32 to vector<16x128xf32>
    %137 = arith.mulf %136, %135 : vector<16x128xf32>
    %138 = math.tanh %137 : vector<16x128xf32>
    %cst_56 = arith.constant 5.000000e-01 : f32
    %139 = vector.broadcast %cst_56 : f32 to vector<16x128xf32>
    %140 = arith.mulf %139, %138 : vector<16x128xf32>
    %cst_57 = arith.constant 5.000000e-01 : f32
    %141 = vector.broadcast %cst_57 : f32 to vector<16x128xf32>
    %142 = arith.addf %140, %141 : vector<16x128xf32>
    %143 = arith.mulf %135, %142 : vector<16x128xf32>
    %144 = vector.shape_cast %143 : vector<16x128xf32> to vector<1x16x128xf32>
    %c0_58 = arith.constant 0 : index
    %c0_59 = arith.constant 0 : index
    %c0_60 = arith.constant 0 : index
    %145 = vector.load %arg8[%c0_58, %c0_59, %c0_60] : memref<1x16x128xf32, #tpu.memory_space<vmem>>, vector<1x16x128xf32>
    tpu.vector_store %arg8[%c0_58, %c0_59, %c0_60], %144 {strides = array<i32>} : memref<1x16x128xf32, #tpu.memory_space<vmem>>, vector<1x16x128xf32>,
    return
  }
  func.func @transform_0(%arg0: i32) -> (i32, i32, i32) {
    %c0_i32 = arith.constant 0 : i32
    %c0_i32_0 = arith.constant 0 : i32
    %c0_i32_1 = arith.constant 0 : i32
    return %arg0, %c0_i32, %c0_i32_0 : i32, i32, i32
  }
  func.func @transform_1(%arg0: i32) -> (i32, i32) {
    %c0_i32 = arith.constant 0 : i32
    %c0_i32_0 = arith.constant 0 : i32
    %c0_i32_1 = arith.constant 0 : i32
    return %c0_i32, %c0_i32_0 : i32, i32
  }
  func.func @transform_2(%arg0: i32) -> (i32, i32) {
    %c0_i32 = arith.constant 0 : i32
    %c0_i32_0 = arith.constant 0 : i32
    %c0_i32_1 = arith.constant 0 : i32
    return %c0_i32, %c0_i32_0 : i32, i32
  }
  func.func @transform_3(%arg0: i32) -> (i32, i32) {
    %c0_i32 = arith.constant 0 : i32
    %c0_i32_0 = arith.constant 0 : i32
    %c0_i32_1 = arith.constant 0 : i32
    return %c0_i32, %c0_i32_0 : i32, i32
  }
  func.func @transform_4(%arg0: i32) -> (i32, i32) {
    %c0_i32 = arith.constant 0 : i32
    %c0_i32_0 = arith.constant 0 : i32
    %c0_i32_1 = arith.constant 0 : i32
    return %c0_i32, %c0_i32_0 : i32, i32
  }
  func.func @transform_5(%arg0: i32) -> (i32, i32) {
    %c0_i32 = arith.constant 0 : i32
    %c0_i32_0 = arith.constant 0 : i32
    %c0_i32_1 = arith.constant 0 : i32
    return %c0_i32, %c0_i32_0 : i32, i32
  }
  func.func @transform_6(%arg0: i32) -> (i32, i32) {
    %c0_i32 = arith.constant 0 : i32
    %c0_i32_0 = arith.constant 0 : i32
    %c0_i32_1 = arith.constant 0 : i32
    return %c0_i32, %c0_i32_0 : i32, i32
  }
  func.func @transform_7(%arg0: i32) -> (i32, i32, i32) {
    %c0_i32 = arith.constant 0 : i32
    %c0_i32_0 = arith.constant 0 : i32
    %c0_i32_1 = arith.constant 0 : i32
    return %arg0, %c0_i32, %c0_i32_0 : i32, i32, i32
  }
}

</mosaic_0001>

<llo_original>
// kernel: forward.1
$region0: #{forward.1}
  #allocation0 [shape = 'u32[]', space=smem, size = 0x4, offset = 0x4, fixed_abs, tag = 'smem constant byte address 0x4 - core index']
  #allocation1 [shape = 'u32[144,128]{1,0:T(1,128)}', space=vmem, size = 0x12000, scoped, tag = 'internal scratch']
  %s0 = inlined_call_operand.vmem [shape: f32[2,16,128], index: 0, kind: input, shape index: {}]
  %s1 = inlined_call_operand.vmem [shape: f32[16,128], index: 1, kind: input, shape index: {}]
  %s2 = inlined_call_operand.vmem [shape: f32[16,128], index: 2, kind: input, shape index: {}]
  %s3 = inlined_call_operand.vmem [shape: bf16[384,128], index: 3, kind: input, shape index: {}]
  %s4 = inlined_call_operand.vmem [shape: f32[1,128], index: 4, kind: input, shape index: {}]
  %s5 = inlined_call_operand.vmem [shape: bf16[384,128], index: 5, kind: input, shape index: {}]
  %s6 = inlined_call_operand.vmem [shape: f32[1,128], index: 6, kind: input, shape index: {}]
  %s7 = inlined_call_operand.vmem [shape: f32[2,16,128], index: 7, kind: output, shape index: {}]
  %s8 = sld [smem:[#allocation0]]
  $region61: #{forward.1} parent=0
    _
  %s10 = ssub.s32 1, %s8
  %s11 = scalar_select 0, %s10, %s8
  loop: start=0, step=1, limit=4
  $region2: #{forward.1} parent=0 // loop_pre_header
    _
  $region3: #{forward.1} parent=0 // loop_header
    %s13 = sphi 0, %s17
    %p14 = scmp.ge.s32.totalorder %s13, 4
    %s23 = sphi 0, %s25
    %s26 = sphi 0, %s23
    %s27 = sphi 0, %s26
    %s43 = sphi 0, %s27
    %s47 = sphi 0, %s47
    %s49 = sphi 0, %s47
    %s50 = sphi 0, %s49
    %s64 = sphi 0, %s50
    %s68 = sphi 0, %s68
    %s70 = sphi 0, %s68
    %s71 = sphi 0, %s70
    %s85 = sphi 0, %s71
    %s89 = sphi 0, %s89
    %s91 = sphi 0, %s89
    %s92 = sphi 0, %s91
    %s106 = sphi 0, %s92
    %s110 = sphi 0, %s110
    %s112 = sphi 0, %s110
    %s113 = sphi 0, %s112
    %s127 = sphi 0, %s113
    %s131 = sphi 0, %s131
    %s133 = sphi 0, %s131
    %s134 = sphi 0, %s133
    %s148 = sphi 0, %s134
    %s152 = sphi 0, %s152
    %s154 = sphi 0, %s152
    %s155 = sphi 0, %s154
    %s169 = sphi 0, %s155
    %s175 = sphi 0, %s177
    %s178 = sphi 0, %s175
    %s179 = sphi 0, %s178
    %s195 = sphi 0, %s179
  $region4: #{forward.1} parent=0 // loop_header_branch
    %16 = sbr.rel (%p14) target = $region8
  $region5: #{forward.1} parent=0 // loop_body
    %s18 = ssub.s32 %s13, 1
    %s19 = ssub.s32 %s13, 2
    %s20 = sadd.s32 %s13, 1
    %s21 = ssub.s32 %s13, %s20
    %p22 = scmp.eq.s32.totalorder %s21, 0
    %s24 = sadd.s32 %s23, 1
    %s25 = scalar_select %p22, %s23, %s24
    %p28 = pneg %p22
    %p29 = scmp.eq.s32.totalorder %s13, 1
    %p30 = por %p28, %p29
    %p31 = scmp.ne.s32.totalorder %s23, %s26
    %p32 = scmp.eq.s32.totalorder %s13, 0
    %p33 = por %p31, %p32
    %p34 = scmp.ne.s32.totalorder %s23, %s26
    %p35 = scmp.eq.s32.totalorder %s18, 1
    %p36 = por %p34, %p35
    %p37 = scmp.ne.s32.totalorder %s26, %s27
    %p38 = scmp.eq.s32.totalorder %s18, 0
    %p39 = por %p37, %p38
    %p40 = scmp.ne.s32.totalorder %s26, %s27
    %p41 = scmp.eq.s32.totalorder %s19, 1
    %p42 = por %p40, %p41
    %p44 = scmp.ne.s32.totalorder %s27, %s43
    %p45 = scmp.eq.s32.totalorder %s19, 0
    %p46 = por %p44, %p45
    %s48 = sadd.s32 %s47, 1
    %p51 = scmp.eq.s32.totalorder %s13, 1
    %p52 = scmp.ne.s32.totalorder %s47, %s49
    %p53 = scmp.eq.s32.totalorder %s13, 0
    %p54 = por %p52, %p53
    %p55 = scmp.ne.s32.totalorder %s47, %s49
    %p56 = scmp.eq.s32.totalorder %s18, 1
    %p57 = por %p55, %p56
    %p58 = scmp.ne.s32.totalorder %s49, %s50
    %p59 = scmp.eq.s32.totalorder %s18, 0
    %p60 = por %p58, %p59
    %p61 = scmp.ne.s32.totalorder %s49, %s50
    %p62 = scmp.eq.s32.totalorder %s19, 1
    %p63 = por %p61, %p62
    %p65 = scmp.ne.s32.totalorder %s50, %s64
    %p66 = scmp.eq.s32.totalorder %s19, 0
    %p67 = por %p65, %p66
    %s69 = sadd.s32 %s68, 1
    %p72 = scmp.eq.s32.totalorder %s13, 1
    %p73 = scmp.ne.s32.totalorder %s68, %s70
    %p74 = scmp.eq.s32.totalorder %s13, 0
    %p75 = por %p73, %p74
    %p76 = scmp.ne.s32.totalorder %s68, %s70
    %p77 = scmp.eq.s32.totalorder %s18, 1
    %p78 = por %p76, %p77
    %p79 = scmp.ne.s32.totalorder %s70, %s71
    %p80 = scmp.eq.s32.totalorder %s18, 0
    %p81 = por %p79, %p80
    %p82 = scmp.ne.s32.totalorder %s70, %s71
    %p83 = scmp.eq.s32.totalorder %s19, 1
    %p84 = por %p82, %p83
    %p86 = scmp.ne.s32.totalorder %s71, %s85
    %p87 = scmp.eq.s32.totalorder %s19, 0
    %p88 = por %p86, %p87
    %s90 = sadd.s32 %s89, 1
    %p93 = scmp.eq.s32.totalorder %s13, 1
    %p94 = scmp.ne.s32.totalorder %s89, %s91
    %p95 = scmp.eq.s32.totalorder %s13, 0
    %p96 = por %p94, %p95
    %p97 = scmp.ne.s32.totalorder %s89, %s91
    %p98 = scmp.eq.s32.totalorder %s18, 1
    %p99 = por %p97, %p98
    %p100 = scmp.ne.s32.totalorder %s91, %s92
    %p101 = scmp.eq.s32.totalorder %s18, 0
    %p102 = por %p100, %p101
    %p103 = scmp.ne.s32.totalorder %s91, %s92
    %p104 = scmp.eq.s32.totalorder %s19, 1
    %p105 = por %p103, %p104
    %p107 = scmp.ne.s32.totalorder %s92, %s106
    %p108 = scmp.eq.s32.totalorder %s19, 0
    %p109 = por %p107, %p108
    %s111 = sadd.s32 %s110, 1
    %p114 = scmp.eq.s32.totalorder %s13, 1
    %p115 = scmp.ne.s32.totalorder %s110, %s112
    %p116 = scmp.eq.s32.totalorder %s13, 0
    %p117 = por %p115, %p116
    %p118 = scmp.ne.s32.totalorder %s110, %s112
    %p119 = scmp.eq.s32.totalorder %s18, 1
    %p120 = por %p118, %p119
    %p121 = scmp.ne.s32.totalorder %s112, %s113
    %p122 = scmp.eq.s32.totalorder %s18, 0
    %p123 = por %p121, %p122
    %p124 = scmp.ne.s32.totalorder %s112, %s113
    %p125 = scmp.eq.s32.totalorder %s19, 1
    %p126 = por %p124, %p125
    %p128 = scmp.ne.s32.totalorder %s113, %s127
    %p129 = scmp.eq.s32.totalorder %s19, 0
    %p130 = por %p128, %p129
    %s132 = sadd.s32 %s131, 1
    %p135 = scmp.eq.s32.totalorder %s13, 1
    %p136 = scmp.ne.s32.totalorder %s131, %s133
    %p137 = scmp.eq.s32.totalorder %s13, 0
    %p138 = por %p136, %p137
    %p139 = scmp.ne.s32.totalorder %s131, %s133
    %p140 = scmp.eq.s32.totalorder %s18, 1
    %p141 = por %p139, %p140
    %p142 = scmp.ne.s32.totalorder %s133, %s134
    %p143 = scmp.eq.s32.totalorder %s18, 0
    %p144 = por %p142, %p143
    %p145 = scmp.ne.s32.totalorder %s133, %s134
    %p146 = scmp.eq.s32.totalorder %s19, 1
    %p147 = por %p145, %p146
    %p149 = scmp.ne.s32.totalorder %s134, %s148
    %p150 = scmp.eq.s32.totalorder %s19, 0
    %p151 = por %p149, %p150
    %s153 = sadd.s32 %s152, 1
    %p156 = scmp.eq.s32.totalorder %s13, 1
    %p157 = scmp.ne.s32.totalorder %s152, %s154
    %p158 = scmp.eq.s32.totalorder %s13, 0
    %p159 = por %p157, %p158
    %p160 = scmp.ne.s32.totalorder %s152, %s154
    %p161 = scmp.eq.s32.totalorder %s18, 1
    %p162 = por %p160, %p161
    %p163 = scmp.ne.s32.totalorder %s154, %s155
    %p164 = scmp.eq.s32.totalorder %s18, 0
    %p165 = por %p163, %p164
    %p166 = scmp.ne.s32.totalorder %s154, %s155
    %p167 = scmp.eq.s32.totalorder %s19, 1
    %p168 = por %p166, %p167
    %p170 = scmp.ne.s32.totalorder %s155, %s169
    %p171 = scmp.eq.s32.totalorder %s19, 0
    %p172 = por %p170, %p171
    %s173 = ssub.s32 %s13, %s20
    %p174 = scmp.eq.s32.totalorder %s173, 0
    %s176 = sadd.s32 %s175, 1
    %s177 = scalar_select %p174, %s175, %s176
    %p180 = pneg %p174
    %p181 = scmp.eq.s32.totalorder %s13, 1
    %p182 = por %p180, %p181
    %p183 = scmp.ne.s32.totalorder %s175, %s178
    %p184 = scmp.eq.s32.totalorder %s13, 0
    %p185 = por %p183, %p184
    %p186 = scmp.ne.s32.totalorder %s175, %s178
    %p187 = scmp.eq.s32.totalorder %s18, 1
    %p188 = por %p186, %p187
    %p189 = scmp.ne.s32.totalorder %s178, %s179
    %p190 = scmp.eq.s32.totalorder %s18, 0
    %p191 = por %p189, %p190
    %p192 = scmp.ne.s32.totalorder %s178, %s179
    %p193 = scmp.eq.s32.totalorder %s19, 1
    %p194 = por %p192, %p193
    %p196 = scmp.ne.s32.totalorder %s179, %s195
    %p197 = scmp.eq.s32.totalorder %s19, 0
    %p198 = por %p196, %p197
    %p199 = scmp.le.s32.totalorder 1, %s13
    %p200 = scmp.lt.s32.totalorder %s13, 3
    %p201 = pnand %p199, %p200
    %p202 = pneg %p201
    // Predicated region
    $region9: #{forward.1} parent=5 // pred_check
      _
    $region10: #{forward.1} parent=5 // pred_check_branch
      %204 = sbr.rel (%p201) target = $region12
    $region11: #{forward.1} parent=5 // pred_region
      %s205 = ssub.s32 %s13, 1
      // Predicated region
      $region13: #{forward.1} parent=11 // pred_check
        %p206 = pneg %p60
      $region14: #{forward.1} parent=11 // pred_check_branch
        %208 = sbr.rel (%p206) target = $region16
      $region15: #{forward.1} parent=11 // pred_region
        _
      $region16: #{forward.1} parent=11 // pred_fallthru
        _
      // Predicated region
      $region17: #{forward.1} parent=11 // pred_check
        %p209 = pneg %p81
      $region18: #{forward.1} parent=11 // pred_check_branch
        %211 = sbr.rel (%p209) target = $region20
      $region19: #{forward.1} parent=11 // pred_region
        _
      $region20: #{forward.1} parent=11 // pred_fallthru
        _
      // Predicated region
      $region21: #{forward.1} parent=11 // pred_check
        %p212 = pneg %p102
      $region22: #{forward.1} parent=11 // pred_check_branch
        %214 = sbr.rel (%p212) target = $region24
      $region23: #{forward.1} parent=11 // pred_region
        _
      $region24: #{forward.1} parent=11 // pred_fallthru
        _
      // Predicated region
      $region25: #{forward.1} parent=11 // pred_check
        %p215 = pneg %p123
      $region26: #{forward.1} parent=11 // pred_check_branch
        %217 = sbr.rel (%p215) target = $region28
      $region27: #{forward.1} parent=11 // pred_region
        _
      $region28: #{forward.1} parent=11 // pred_fallthru
        _
      // Predicated region
      $region29: #{forward.1} parent=11 // pred_check
        %p218 = pneg %p144
      $region30: #{forward.1} parent=11 // pred_check_branch
        %220 = sbr.rel (%p218) target = $region32
      $region31: #{forward.1} parent=11 // pred_region
        _
      $region32: #{forward.1} parent=11 // pred_fallthru
        _
      // Predicated region
      $region33: #{forward.1} parent=11 // pred_check
        %p221 = pneg %p165
      $region34: #{forward.1} parent=11 // pred_check_branch
        %223 = sbr.rel (%p221) target = $region36
      $region35: #{forward.1} parent=11 // pred_region
        _
      $region36: #{forward.1} parent=11 // pred_fallthru
        _
    $region12: #{forward.1} parent=5 // pred_fallthru
      _
    %p224 = scmp.lt.s32.totalorder %s13, 2
    // Predicated region
    $region37: #{forward.1} parent=5 // pred_check
      %p225 = pneg %p224
    $region38: #{forward.1} parent=5 // pred_check_branch
      %227 = sbr.rel (%p225) target = $region40
    $region39: #{forward.1} parent=5 // pred_region
      // Predicated region
      $region41: #{forward.1} parent=39 // pred_check
        %p228 = pneg %p33
      $region42: #{forward.1} parent=39 // pred_check_branch
        %230 = sbr.rel (%p228) target = $region44
      $region43: #{forward.1} parent=39 // pred_region
        %p231 = scmp.lt.s32.totalorder %s13, 1
        %s232 = scalar_select %p231, %s13, 1
        %s233 = smul.addr %s232, 2
        %s234 = smul.addr %s233, 8
        %s235 = scalar_lea.vmem %s0, %s234
      $region44: #{forward.1} parent=39 // pred_fallthru
        _
    $region40: #{forward.1} parent=5 // pred_fallthru
      _
    %p236 = scmp.le.s32.totalorder 1, %s13
    %p237 = scmp.lt.s32.totalorder %s13, 3
    %p238 = pnand %p236, %p237
    %p239 = pneg %p238
    // Predicated region
    $region45: #{forward.1} parent=5 // pred_check
      _
    $region46: #{forward.1} parent=5 // pred_check_branch
      %241 = sbr.rel (%p238) target = $region48
    $region47: #{forward.1} parent=5 // pred_region
      %s242 = ssub.s32 %s13, 1
      %p243 = scmp.lt.s32.totalorder %s18, 1
      %s244 = scalar_select %p243, %s18, 1
      %s245 = smul.addr %s244, 2
      %s246 = smul.addr %s245, 8
      %s247 = scalar_lea.vmem %s0, %s246
      %p248 = pneg %p39
      %p249 = pneg %p36
      %p250 = pneg %p60
      %p251 = pneg %p57
      %p252 = pneg %p81
      %p253 = pneg %p78
      %p254 = pneg %p102
      %p255 = pneg %p99
      %p256 = pneg %p123
      %p257 = pneg %p120
      %p258 = pneg %p144
      %p259 = pneg %p141
      %p260 = pneg %p165
      %p261 = pneg %p162
      %p262 = pneg %p191
      %p263 = pneg %p188
      %p264 = scmp.lt.s32.totalorder %s18, 1
      %s265 = scalar_select %p264, %s18, 1
      %s266 = smul.addr %s265, 2
      %s267 = smul.addr %s266, 8
      %s268 = scalar_lea.vmem %s7, %s267
      %p269 = scmp.lt.s32.totalorder %s18, 1
      %s270 = scalar_select %p269, %s18, 1
      %s271 = smul.addr %s270, 2
      %s272 = smul.addr %s271, 8
      %s273 = scalar_lea.vmem %s0, %s272
      %p274 = scmp.lt.s32.totalorder %s18, 1
      %s275 = scalar_select %p274, %s18, 1
      %s276 = smul.addr %s275, 2
      %s277 = smul.addr %s276, 8
      %s278 = scalar_lea.vmem %s7, %s277
      %v280 = vld [vmem:[%s273] sm:$0xff]
      %v281 = vld [vmem:[%s273 + $0x8] sm:$0xff]
      %v282 = vadd.f32 %v280, %v281
      %283 = vadd.xlane.f32.xlu0 %v282
      %v284 = vpop.xlane.xlu0 %283
      %v285 = vrot.slane %v284, 4
      %v286 = vadd.f32 %v284, %v285
      %v287 = vrot.slane %v286, 2
      %v288 = vadd.f32 %v286, %v287
      %v289 = vrot.slane %v288, 1
      %v290 = vadd.f32 %v288, %v289
      %v291 = vmul.f32 %v280, %v280
      %v292 = vmul.f32 %v281, %v281
      %v293 = vadd.f32 %v291, %v292
      %294 = vadd.xlane.f32.xlu0 %v293
      %v295 = vpop.xlane.xlu0 %294
      %v296 = vrot.slane %v295, 4
      %v297 = vadd.f32 %v295, %v296
      %v298 = vrot.slane %v297, 2
      %v299 = vadd.f32 %v297, %v298
      %v300 = vrot.slane %v299, 1
      %v301 = vadd.f32 %v299, %v300
      %v302 = vmul.f32 %v290, 0.0009765625
      %v303 = vmul.f32 %v301, 0.0009765625
      %v304 = vmul.f32 %v302, %v302
      %v305 = vsub.f32 %v303, %v304
      %v306 = vadd.f32 %v305, 1e-05
      %v307 = vrsqrt.pop %v306
      %v308 = vsub.f32 %v280, %v302
      %v309 = vsub.f32 %v281, %v302
      %v310 = vmul.f32 %v308, %v307
      %v311 = vmul.f32 %v309, %v307
      %v312 = vld [vmem:[%s1] sm:$0xff]
      %v313 = vld [vmem:[%s1 + $0x8] sm:$0xff]
      %v314 = vmul.f32 %v310, %v312
      %v315 = vmul.f32 %v311, %v313
      %v316 = vld [vmem:[%s2] sm:$0xff]
      %v317 = vld [vmem:[%s2 + $0x8] sm:$0xff]
      %v318 = vadd.f32 %v314, %v316
      %v319 = vadd.f32 %v315, %v317
      %v320 = vrot.slane %v318, 7
      %v321 = vrot.slane %v319, 7
      %v322 = vlaneseq
      %v323 = vshrl.u32 %v322, 7
      %vm324 = vcmp.lt.s32.totalorder %v323, 1
      %v325 = vsel %vm324, %v320, %v321
      %v326 = vsel %vm324, %v321, %v320
      %v327 = vadd.s32 %v323, 8
      %vm328 = vcmp.lt.s32.totalorder %v323, 0
      %v329 = vsub.s32 0, %v323
      %v330 = vsel %vm328, %v329, %v323
      %v331 = vshrl.u32 %v330, 4
      %v332 = vand.u32 %v330, 15
      %v333 = vsub.s32 0, %v332
      %v334 = vsel %vm328, %v333, %v332
      %vm335 = vcmp.lt.s32.totalorder %v327, 0
      %v336 = vsub.s32 0, %v327
      %v337 = vsel %vm335, %v336, %v327
      %v338 = vshrl.u32 %v337, 4
      %v339 = vand.u32 %v337, 15
      %v340 = vsub.s32 0, %v339
      %v341 = vsel %vm335, %v340, %v339
      %vm342 = vcmp.ne.s32.totalorder %v334, 0
      %vm343 = vcmp.ne.s32.totalorder %v341, 0
      %vm344 = vcmp.lt.s32.totalorder %v334, 0
      %vm345 = vcmp.lt.s32.totalorder %v341, 0
      %vm346 = vmand %vm344, %vm342
      %vm347 = vmand %vm345, %vm343
      %v348 = vadd.s32 %v334, 16
      %v349 = vadd.s32 %v341, 16
      %v350 = vsel %vm346, %v348, %v334
      %v351 = vsel %vm347, %v349, %v341
      %vm352 = vcmp.lt.s32.totalorder %v350, 1
      %vm353 = vcmp.lt.s32.totalorder %v351, 1
      %v354 = vsel %vm352, 0.0, %v326
      %v355 = vsel %vm353, 0.0, %v325
      %v356 = vrot.slane %v318, 1
      %v357 = vrot.slane %v319, 1
      %vm358 = vcmp.lt.s32.totalorder %v323, 7
      %v359 = vsel %vm358, %v356, %v357
      %v360 = vsel %vm358, %v357, %v356
      %vm361 = vcmp.ge.s32.totalorder %v350, 15
      %vm362 = vcmp.ge.s32.totalorder %v351, 15
      %v363 = vsel %vm361, 0.0, %v359
      %v364 = vsel %vm362, 0.0, %v360
      %v365 = vpack.c.bf16 %v355, %v354
      %v366 = vpack.c.bf16 %v319, %v318
      %v367 = vpack.c.bf16 %v364, %v363
      %v368 = vld [vmem:[%s3] sm:$0xf]
      %v369 = vld [vmem:[%s3 + $0x4] sm:$0xf]
      %v370 = vld [vmem:[%s3 + $0x8] sm:$0xf]
      %v371 = vld [vmem:[%s3 + $0xc] sm:$0xf]
      %v372 = vld [vmem:[%s3 + $0x10] sm:$0xf]
      %v373 = vld [vmem:[%s3 + $0x14] sm:$0xf]
      %v374 = vld [vmem:[%s3 + $0x18] sm:$0xf]
      %v375 = vld [vmem:[%s3 + $0x1c] sm:$0xf]
      %v376 = vld [vmem:[%s3 + $0x20] sm:$0xf]
      %v377 = vld [vmem:[%s3 + $0x24] sm:$0xf]
      %v378 = vld [vmem:[%s3 + $0x28] sm:$0xf]
      %v379 = vld [vmem:[%s3 + $0x2c] sm:$0xf]
      %v380 = vld [vmem:[%s3 + $0x30] sm:$0xf]
      %v381 = vld [vmem:[%s3 + $0x34] sm:$0xf]
      %v382 = vld [vmem:[%s3 + $0x38] sm:$0xf]
      %v383 = vld [vmem:[%s3 + $0x3c] sm:$0xf]
      %v384 = vld [vmem:[%s3 + $0x40] sm:$0xf]
      %v385 = vld [vmem:[%s3 + $0x44] sm:$0xf]
      %v386 = vld [vmem:[%s3 + $0x48] sm:$0xf]
      %v387 = vld [vmem:[%s3 + $0x4c] sm:$0xf]
      %v388 = vld [vmem:[%s3 + $0x50] sm:$0xf]
      %v389 = vld [vmem:[%s3 + $0x54] sm:$0xf]
      %v390 = vld [vmem:[%s3 + $0x58] sm:$0xf]
      %v391 = vld [vmem:[%s3 + $0x5c] sm:$0xf]
      %v392 = vld [vmem:[%s3 + $0x60] sm:$0xf]
      %v393 = vld [vmem:[%s3 + $0x64] sm:$0xf]
      %v394 = vld [vmem:[%s3 + $0x68] sm:$0xf]
      %v395 = vld [vmem:[%s3 + $0x6c] sm:$0xf]
      %v396 = vld [vmem:[%s3 + $0x70] sm:$0xf]
      %v397 = vld [vmem:[%s3 + $0x74] sm:$0xf]
      %v398 = vld [vmem:[%s3 + $0x78] sm:$0xf]
      %v399 = vld [vmem:[%s3 + $0x7c] sm:$0xf]
      %v400 = vld [vmem:[%s3 + $0x80] sm:$0xf]
      %v401 = vld [vmem:[%s3 + $0x84] sm:$0xf]
      %v402 = vld [vmem:[%s3 + $0x88] sm:$0xf]
      %v403 = vld [vmem:[%s3 + $0x8c] sm:$0xf]
      %v404 = vld [vmem:[%s3 + $0x90] sm:$0xf]
      %v405 = vld [vmem:[%s3 + $0x94] sm:$0xf]
      %v406 = vld [vmem:[%s3 + $0x98] sm:$0xf]
      %v407 = vld [vmem:[%s3 + $0x9c] sm:$0xf]
      %v408 = vld [vmem:[%s3 + $0xa0] sm:$0xf]
      %v409 = vld [vmem:[%s3 + $0xa4] sm:$0xf]
      %v410 = vld [vmem:[%s3 + $0xa8] sm:$0xf]
      %v411 = vld [vmem:[%s3 + $0xac] sm:$0xf]
      %v412 = vld [vmem:[%s3 + $0xb0] sm:$0xf]
      %v413 = vld [vmem:[%s3 + $0xb4] sm:$0xf]
      %v414 = vld [vmem:[%s3 + $0xb8] sm:$0xf]
      %v415 = vld [vmem:[%s3 + $0xbc] sm:$0xf]
      %v416 = vld [vmem:[%s4] sm:$0x1]
      %v418 = vlaneseq
      %v419 = vshrl.u32 %v418, 7
      %v420 = vsub.s32 0, %v419
      %v421 = vrot.slane %v416, %v420
      %v471 = vunpack.c.l.b16 %v368
      %v472 = vunpack.c.l.b16 %v369
      %v473 = vunpack.c.l.b16 %v370
      %v474 = vunpack.c.l.b16 %v371
      %v475 = vunpack.c.l.b16 %v372
      %v476 = vunpack.c.l.b16 %v373
      %v477 = vunpack.c.l.b16 %v374
      %v478 = vunpack.c.l.b16 %v375
      %v479 = vunpack.c.l.b16 %v376
      %v480 = vunpack.c.l.b16 %v377
      %v481 = vunpack.c.l.b16 %v378
      %v482 = vunpack.c.l.b16 %v379
      %v483 = vunpack.c.l.b16 %v380
      %v484 = vunpack.c.l.b16 %v381
      %v485 = vunpack.c.l.b16 %v382
      %v486 = vunpack.c.l.b16 %v383
      %v487 = vunpack.c.l.b16 %v384
      %v488 = vunpack.c.l.b16 %v385
      %v489 = vunpack.c.l.b16 %v386
      %v490 = vunpack.c.l.b16 %v387
      %v491 = vunpack.c.l.b16 %v388
      %v492 = vunpack.c.l.b16 %v389
      %v493 = vunpack.c.l.b16 %v390
      %v494 = vunpack.c.l.b16 %v391
      %v495 = vunpack.c.l.b16 %v392
      %v496 = vunpack.c.l.b16 %v393
      %v497 = vunpack.c.l.b16 %v394
      %v498 = vunpack.c.l.b16 %v395
      %v499 = vunpack.c.l.b16 %v396
      %v500 = vunpack.c.l.b16 %v397
      %v501 = vunpack.c.l.b16 %v398
      %v502 = vunpack.c.l.b16 %v399
      %v503 = vunpack.c.l.b16 %v400
      %v504 = vunpack.c.l.b16 %v401
      %v505 = vunpack.c.l.b16 %v402
      %v506 = vunpack.c.l.b16 %v403
      %v507 = vunpack.c.l.b16 %v404
      %v508 = vunpack.c.l.b16 %v405
      %v509 = vunpack.c.l.b16 %v406
      %v510 = vunpack.c.l.b16 %v407
      %v511 = vunpack.c.l.b16 %v408
      %v512 = vunpack.c.l.b16 %v409
      %v513 = vunpack.c.l.b16 %v410
      %v514 = vunpack.c.l.b16 %v411
      %v515 = vunpack.c.l.b16 %v412
      %v516 = vunpack.c.l.b16 %v413
      %v517 = vunpack.c.l.b16 %v414
      %v518 = vunpack.c.l.b16 %v415
      %v519 = vpack.c.b16 %v472, %v471
      %v520 = vpack.c.b16 %v474, %v473
      %v521 = vpack.c.b16 %v476, %v475
      %v522 = vpack.c.b16 %v478, %v477
      %v523 = vpack.c.b16 %v480, %v479
      %v524 = vpack.c.b16 %v482, %v481
      %v525 = vpack.c.b16 %v484, %v483
      %v526 = vpack.c.b16 %v486, %v485
      %v527 = vpack.c.b16 %v488, %v487
      %v528 = vpack.c.b16 %v490, %v489
      %v529 = vpack.c.b16 %v492, %v491
      %v530 = vpack.c.b16 %v494, %v493
      %v531 = vpack.c.b16 %v496, %v495
      %v532 = vpack.c.b16 %v498, %v497
      %v533 = vpack.c.b16 %v500, %v499
      %v534 = vpack.c.b16 %v502, %v501
      %v535 = vpack.c.b16 %v504, %v503
      %v536 = vpack.c.b16 %v506, %v505
      %v537 = vpack.c.b16 %v508, %v507
      %v538 = vpack.c.b16 %v510, %v509
      %v539 = vpack.c.b16 %v512, %v511
      %v540 = vpack.c.b16 %v514, %v513
      %v541 = vpack.c.b16 %v516, %v515
      %v542 = vpack.c.b16 %v518, %v517
      %567 = vmatprep.subr.bf16.mxu0 0
      %568 = vmatpush1.bf16.msra.mxu0 %v519
      %569 = vmatprep.subr.bf16.mxu0 0
      %570 = vmatpush1.bf16.msra.mxu0 %v520
      %571 = vmatprep.subr.bf16.mxu0 0
      %572 = vmatpush1.bf16.msra.mxu0 %v521
      %573 = vmatprep.subr.bf16.mxu0 0
      %574 = vmatpush1.bf16.msra.mxu0 %v522
      %575 = vmatprep.subr.bf16.mxu0 0
      %576 = vmatpush1.bf16.msra.mxu0 %v523
      %577 = vmatprep.subr.bf16.mxu0 0
      %578 = vmatpush1.bf16.msra.mxu0 %v524
      %579 = vmatprep.subr.bf16.mxu0 0
      %580 = vmatpush1.bf16.msra.mxu0 %v525
      %581 = vmatprep.subr.bf16.mxu0 0
      %582 = vmatpush1.bf16.msra.mxu0 %v526
      %583 = vmatprep.subr.bf16.mxu0 0
      %584 = vmatpush1.bf16.msra.mxu0 %v527
      %585 = vmatprep.subr.bf16.mxu0 0
      %586 = vmatpush1.bf16.msra.mxu0 %v528
      %587 = vmatprep.subr.bf16.mxu0 0
      %588 = vmatpush1.bf16.msra.mxu0 %v529
      %589 = vmatprep.subr.bf16.mxu0 0
      %590 = vmatpush1.bf16.msra.mxu0 %v530
      %591 = vmatprep.subr.bf16.mxu0 0
      %592 = vmatpush1.bf16.msra.mxu0 %v531
      %593 = vmatprep.subr.bf16.mxu0 0
      %594 = vmatpush1.bf16.msra.mxu0 %v532
      %595 = vmatprep.subr.bf16.mxu0 0
      %596 = vmatpush1.bf16.msra.mxu0 %v533
      %597 = vmatprep.subr.bf16.mxu0 0
      %598 = vmatpush1.bf16.msra.mxu0 %v534
      %599 = vmatprep.mubr.bf16.mxu0 %v366
      %600 = vmatmul.mubr.bf16.gmra.mrb[0].mxu0 %v365
      %v601 = vpop.f32.mrb[0].mxu0
      %v602 = vadd.f32 %v421, %v601
      %v603 = vpop.f32.mrb[0].mxu0
      %v604 = vpop.f32.mrb[0].mxu0
      %v605 = vadd.f32 %v421, %v604
      %v606 = vpop.f32.mrb[0].mxu0
      %607 = vdwg.mxu0
      %608 = vmatprep.subr.bf16.mxu0 0
      %609 = vmatpush1.bf16.msra.mxu0 %v535
      %610 = vmatprep.subr.bf16.mxu0 0
      %611 = vmatpush1.bf16.msra.mxu0 %v536
      %612 = vmatprep.subr.bf16.mxu0 0
      %613 = vmatpush1.bf16.msra.mxu0 %v537
      %614 = vmatprep.subr.bf16.mxu0 0
      %615 = vmatpush1.bf16.msra.mxu0 %v538
      %616 = vmatprep.subr.bf16.mxu0 0
      %617 = vmatpush1.bf16.msra.mxu0 %v539
      %618 = vmatprep.subr.bf16.mxu0 0
      %619 = vmatpush1.bf16.msra.mxu0 %v540
      %620 = vmatprep.subr.bf16.mxu0 0
      %621 = vmatpush1.bf16.msra.mxu0 %v541
      %622 = vmatprep.subr.bf16.mxu0 0
      %623 = vmatpush1.bf16.msra.mxu0 %v542
      %624 = vmatprep.subr.bf16.mxu0 0
      %625 = vmatpush1.bf16.msra.mxu0 0
      %626 = vmatprep.subr.bf16.mxu0 0
      %627 = vmatpush1.bf16.msra.mxu0 0
      %628 = vmatprep.subr.bf16.mxu0 0
      %629 = vmatpush1.bf16.msra.mxu0 0
      %630 = vmatprep.subr.bf16.mxu0 0
      %631 = vmatpush1.bf16.msra.mxu0 0
      %632 = vmatprep.subr.bf16.mxu0 0
      %633 = vmatpush1.bf16.msra.mxu0 0
      %634 = vmatprep.subr.bf16.mxu0 0
      %635 = vmatpush1.bf16.msra.mxu0 0
      %636 = vmatprep.subr.bf16.mxu0 0
      %637 = vmatpush1.bf16.msra.mxu0 0
      %638 = vmatprep.subr.bf16.mxu0 0
      %639 = vmatpush1.bf16.msra.mxu0 0
      %640 = vmatprep.mubr.bf16.mxu0 0
      %641 = vmatmul.mubr.bf16.gmra.mrb[0].mxu0 %v367
      %v642 = vpop.f32.mrb[0].mxu0
      %v643 = vadd.f32 %v602, %v642
      %v644 = vpop.f32.mrb[0].mxu0
      %v645 = vpop.f32.mrb[0].mxu0
      %v646 = vadd.f32 %v605, %v645
      %v647 = vpop.f32.mrb[0].mxu0
      %648 = vdwg.mxu0
      %v649 = vmul.f32 %v643, 0.5
      %v650 = vmul.f32 %v646, 0.5
      %v651 = vtanh.pop %v649
      %v652 = vtanh.pop %v650
      %v653 = vmul.f32 %v651, 0.5
      %v654 = vmul.f32 %v652, 0.5
      %v655 = vadd.f32 %v653, 0.5
      %v656 = vadd.f32 %v654, 0.5
      %v657 = vmul.f32 %v643, %v655
      %v658 = vmul.f32 %v646, %v656
      %v659 = vrot.slane %v657, 7
      %v660 = vrot.slane %v658, 7
      %v661 = vsel %vm324, %v659, %v660
      %v662 = vsel %vm324, %v660, %v659
      %v663 = vsel %vm352, 0.0, %v662
      %v664 = vsel %vm353, 0.0, %v661
      %v665 = vrot.slane %v657, 1
      %v666 = vrot.slane %v658, 1
      %v667 = vsel %vm358, %v665, %v666
      %v668 = vsel %vm358, %v666, %v665
      %v669 = vsel %vm361, 0.0, %v667
      %v670 = vsel %vm362, 0.0, %v668
      %v671 = vpack.c.bf16 %v664, %v663
      %v672 = vpack.c.bf16 %v658, %v657
      %v673 = vpack.c.bf16 %v670, %v669
      %v674 = vld [vmem:[%s5] sm:$0xf]
      %v675 = vld [vmem:[%s5 + $0x4] sm:$0xf]
      %v676 = vld [vmem:[%s5 + $0x8] sm:$0xf]
      %v677 = vld [vmem:[%s5 + $0xc] sm:$0xf]
      %v678 = vld [vmem:[%s5 + $0x10] sm:$0xf]
      %v679 = vld [vmem:[%s5 + $0x14] sm:$0xf]
      %v680 = vld [vmem:[%s5 + $0x18] sm:$0xf]
      %v681 = vld [vmem:[%s5 + $0x1c] sm:$0xf]
      %v682 = vld [vmem:[%s5 + $0x20] sm:$0xf]
      %v683 = vld [vmem:[%s5 + $0x24] sm:$0xf]
      %v684 = vld [vmem:[%s5 + $0x28] sm:$0xf]
      %v685 = vld [vmem:[%s5 + $0x2c] sm:$0xf]
      %v686 = vld [vmem:[%s5 + $0x30] sm:$0xf]
      %v687 = vld [vmem:[%s5 + $0x34] sm:$0xf]
      %v688 = vld [vmem:[%s5 + $0x38] sm:$0xf]
      %v689 = vld [vmem:[%s5 + $0x3c] sm:$0xf]
      %v690 = vld [vmem:[%s5 + $0x40] sm:$0xf]
      %v691 = vld [vmem:[%s5 + $0x44] sm:$0xf]
      %v692 = vld [vmem:[%s5 + $0x48] sm:$0xf]
      %v693 = vld [vmem:[%s5 + $0x4c] sm:$0xf]
      %v694 = vld [vmem:[%s5 + $0x50] sm:$0xf]
      %v695 = vld [vmem:[%s5 + $0x54] sm:$0xf]
      %v696 = vld [vmem:[%s5 + $0x58] sm:$0xf]
      %v697 = vld [vmem:[%s5 + $0x5c] sm:$0xf]
      %v698 = vld [vmem:[%s5 + $0x60] sm:$0xf]
      %v699 = vld [vmem:[%s5 + $0x64] sm:$0xf]
      %v700 = vld [vmem:[%s5 + $0x68] sm:$0xf]
      %v701 = vld [vmem:[%s5 + $0x6c] sm:$0xf]
      %v702 = vld [vmem:[%s5 + $0x70] sm:$0xf]
      %v703 = vld [vmem:[%s5 + $0x74] sm:$0xf]
      %v704 = vld [vmem:[%s5 + $0x78] sm:$0xf]
      %v705 = vld [vmem:[%s5 + $0x7c] sm:$0xf]
      %v706 = vld [vmem:[%s5 + $0x80] sm:$0xf]
      %v707 = vld [vmem:[%s5 + $0x84] sm:$0xf]
      %v708 = vld [vmem:[%s5 + $0x88] sm:$0xf]
      %v709 = vld [vmem:[%s5 + $0x8c] sm:$0xf]
      %v710 = vld [vmem:[%s5 + $0x90] sm:$0xf]
      %v711 = vld [vmem:[%s5 + $0x94] sm:$0xf]
      %v712 = vld [vmem:[%s5 + $0x98] sm:$0xf]
      %v713 = vld [vmem:[%s5 + $0x9c] sm:$0xf]
      %v714 = vld [vmem:[%s5 + $0xa0] sm:$0xf]
      %v715 = vld [vmem:[%s5 + $0xa4] sm:$0xf]
      %v716 = vld [vmem:[%s5 + $0xa8] sm:$0xf]
      %v717 = vld [vmem:[%s5 + $0xac] sm:$0xf]
      %v718 = vld [vmem:[%s5 + $0xb0] sm:$0xf]
      %v719 = vld [vmem:[%s5 + $0xb4] sm:$0xf]
      %v720 = vld [vmem:[%s5 + $0xb8] sm:$0xf]
      %v721 = vld [vmem:[%s5 + $0xbc] sm:$0xf]
      %v722 = vld [vmem:[%s6] sm:$0x1]
      %v724 = vlaneseq
      %v725 = vshrl.u32 %v724, 7
      %v726 = vsub.s32 0, %v725
      %v727 = vrot.slane %v722, %v726
      %v777 = vunpack.c.l.b16 %v674
      %v778 = vunpack.c.l.b16 %v675
      %v779 = vunpack.c.l.b16 %v676
      %v780 = vunpack.c.l.b16 %v677
      %v781 = vunpack.c.l.b16 %v678
      %v782 = vunpack.c.l.b16 %v679
      %v783 = vunpack.c.l.b16 %v680
      %v784 = vunpack.c.l.b16 %v681
      %v785 = vunpack.c.l.b16 %v682
      %v786 = vunpack.c.l.b16 %v683
      %v787 = vunpack.c.l.b16 %v684
      %v788 = vunpack.c.l.b16 %v685
      %v789 = vunpack.c.l.b16 %v686
      %v790 = vunpack.c.l.b16 %v687
      %v791 = vunpack.c.l.b16 %v688
      %v792 = vunpack.c.l.b16 %v689
      %v793 = vunpack.c.l.b16 %v690
      %v794 = vunpack.c.l.b16 %v691
      %v795 = vunpack.c.l.b16 %v692
      %v796 = vunpack.c.l.b16 %v693
      %v797 = vunpack.c.l.b16 %v694
      %v798 = vunpack.c.l.b16 %v695
      %v799 = vunpack.c.l.b16 %v696
      %v800 = vunpack.c.l.b16 %v697
      %v801 = vunpack.c.l.b16 %v698
      %v802 = vunpack.c.l.b16 %v699
      %v803 = vunpack.c.l.b16 %v700
      %v804 = vunpack.c.l.b16 %v701
      %v805 = vunpack.c.l.b16 %v702
      %v806 = vunpack.c.l.b16 %v703
      %v807 = vunpack.c.l.b16 %v704
      %v808 = vunpack.c.l.b16 %v705
      %v809 = vunpack.c.l.b16 %v706
      %v810 = vunpack.c.l.b16 %v707
      %v811 = vunpack.c.l.b16 %v708
      %v812 = vunpack.c.l.b16 %v709
      %v813 = vunpack.c.l.b16 %v710
      %v814 = vunpack.c.l.b16 %v711
      %v815 = vunpack.c.l.b16 %v712
      %v816 = vunpack.c.l.b16 %v713
      %v817 = vunpack.c.l.b16 %v714
      %v818 = vunpack.c.l.b16 %v715
      %v819 = vunpack.c.l.b16 %v716
      %v820 = vunpack.c.l.b16 %v717
      %v821 = vunpack.c.l.b16 %v718
      %v822 = vunpack.c.l.b16 %v719
      %v823 = vunpack.c.l.b16 %v720
      %v824 = vunpack.c.l.b16 %v721
      %v825 = vpack.c.b16 %v778, %v777
      %v826 = vpack.c.b16 %v780, %v779
      %v827 = vpack.c.b16 %v782, %v781
      %v828 = vpack.c.b16 %v784, %v783
      %v829 = vpack.c.b16 %v786, %v785
      %v830 = vpack.c.b16 %v788, %v787
      %v831 = vpack.c.b16 %v790, %v789
      %v832 = vpack.c.b16 %v792, %v791
      %v833 = vpack.c.b16 %v794, %v793
      %v834 = vpack.c.b16 %v796, %v795
      %v835 = vpack.c.b16 %v798, %v797
      %v836 = vpack.c.b16 %v800, %v799
      %v837 = vpack.c.b16 %v802, %v801
      %v838 = vpack.c.b16 %v804, %v803
      %v839 = vpack.c.b16 %v806, %v805
      %v840 = vpack.c.b16 %v808, %v807
      %v841 = vpack.c.b16 %v810, %v809
      %v842 = vpack.c.b16 %v812, %v811
      %v843 = vpack.c.b16 %v814, %v813
      %v844 = vpack.c.b16 %v816, %v815
      %v845 = vpack.c.b16 %v818, %v817
      %v846 = vpack.c.b16 %v820, %v819
      %v847 = vpack.c.b16 %v822, %v821
      %v848 = vpack.c.b16 %v824, %v823
      %873 = vmatprep.subr.bf16.mxu0 0
      %874 = vmatpush1.bf16.msra.mxu0 %v825
      %875 = vmatprep.subr.bf16.mxu0 0
      %876 = vmatpush1.bf16.msra.mxu0 %v826
      %877 = vmatprep.subr.bf16.mxu0 0
      %878 = vmatpush1.bf16.msra.mxu0 %v827
      %879 = vmatprep.subr.bf16.mxu0 0
      %880 = vmatpush1.bf16.msra.mxu0 %v828
      %881 = vmatprep.subr.bf16.mxu0 0
      %882 = vmatpush1.bf16.msra.mxu0 %v829
      %883 = vmatprep.subr.bf16.mxu0 0
      %884 = vmatpush1.bf16.msra.mxu0 %v830
      %885 = vmatprep.subr.bf16.mxu0 0
      %886 = vmatpush1.bf16.msra.mxu0 %v831
      %887 = vmatprep.subr.bf16.mxu0 0
      %888 = vmatpush1.bf16.msra.mxu0 %v832
      %889 = vmatprep.subr.bf16.mxu0 0
      %890 = vmatpush1.bf16.msra.mxu0 %v833
      %891 = vmatprep.subr.bf16.mxu0 0
      %892 = vmatpush1.bf16.msra.mxu0 %v834
      %893 = vmatprep.subr.bf16.mxu0 0
      %894 = vmatpush1.bf16.msra.mxu0 %v835
      %895 = vmatprep.subr.bf16.mxu0 0
      %896 = vmatpush1.bf16.msra.mxu0 %v836
      %897 = vmatprep.subr.bf16.mxu0 0
      %898 = vmatpush1.bf16.msra.mxu0 %v837
      %899 = vmatprep.subr.bf16.mxu0 0
      %900 = vmatpush1.bf16.msra.mxu0 %v838
      %901 = vmatprep.subr.bf16.mxu0 0
      %902 = vmatpush1.bf16.msra.mxu0 %v839
      %903 = vmatprep.subr.bf16.mxu0 0
      %904 = vmatpush1.bf16.msra.mxu0 %v840
      %905 = vmatprep.mubr.bf16.mxu0 %v672
      %906 = vmatmul.mubr.bf16.gmra.mrb[0].mxu0 %v671
      %v907 = vpop.f32.mrb[0].mxu0
      %v908 = vadd.f32 %v727, %v907
      %v909 = vpop.f32.mrb[0].mxu0
      %v910 = vpop.f32.mrb[0].mxu0
      %v911 = vadd.f32 %v727, %v910
      %v912 = vpop.f32.mrb[0].mxu0
      %913 = vdwg.mxu0
      %914 = vmatprep.subr.bf16.mxu0 0
      %915 = vmatpush1.bf16.msra.mxu0 %v841
      %916 = vmatprep.subr.bf16.mxu0 0
      %917 = vmatpush1.bf16.msra.mxu0 %v842
      %918 = vmatprep.subr.bf16.mxu0 0
      %919 = vmatpush1.bf16.msra.mxu0 %v843
      %920 = vmatprep.subr.bf16.mxu0 0
      %921 = vmatpush1.bf16.msra.mxu0 %v844
      %922 = vmatprep.subr.bf16.mxu0 0
      %923 = vmatpush1.bf16.msra.mxu0 %v845
      %924 = vmatprep.subr.bf16.mxu0 0
      %925 = vmatpush1.bf16.msra.mxu0 %v846
      %926 = vmatprep.subr.bf16.mxu0 0
      %927 = vmatpush1.bf16.msra.mxu0 %v847
      %928 = vmatprep.subr.bf16.mxu0 0
      %929 = vmatpush1.bf16.msra.mxu0 %v848
      %930 = vmatprep.subr.bf16.mxu0 0
      %931 = vmatpush1.bf16.msra.mxu0 0
      %932 = vmatprep.subr.bf16.mxu0 0
      %933 = vmatpush1.bf16.msra.mxu0 0
      %934 = vmatprep.subr.bf16.mxu0 0
      %935 = vmatpush1.bf16.msra.mxu0 0
      %936 = vmatprep.subr.bf16.mxu0 0
      %937 = vmatpush1.bf16.msra.mxu0 0
      %938 = vmatprep.subr.bf16.mxu0 0
      %939 = vmatpush1.bf16.msra.mxu0 0
      %940 = vmatprep.subr.bf16.mxu0 0
      %941 = vmatpush1.bf16.msra.mxu0 0
      %942 = vmatprep.subr.bf16.mxu0 0
      %943 = vmatpush1.bf16.msra.mxu0 0
      %944 = vmatprep.subr.bf16.mxu0 0
      %945 = vmatpush1.bf16.msra.mxu0 0
      %946 = vmatprep.mubr.bf16.mxu0 0
      %947 = vmatmul.mubr.bf16.gmra.mrb[0].mxu0 %v673
      %v948 = vpop.f32.mrb[0].mxu0
      %v949 = vadd.f32 %v908, %v948
      %v950 = vpop.f32.mrb[0].mxu0
      %v951 = vpop.f32.mrb[0].mxu0
      %v952 = vadd.f32 %v911, %v951
      %v953 = vpop.f32.mrb[0].mxu0
      %954 = vdwg.mxu0
      %v955 = vmul.f32 %v949, 0.5
      %v956 = vmul.f32 %v952, 0.5
      %v957 = vtanh.pop %v955
      %v958 = vtanh.pop %v956
      %v959 = vmul.f32 %v957, 0.5
      %v960 = vmul.f32 %v958, 0.5
      %v961 = vadd.f32 %v959, 0.5
      %v962 = vadd.f32 %v960, 0.5
      %v963 = vmul.f32 %v949, %v961
      %v964 = vmul.f32 %v952, %v962
      %965 = vst [vmem:[%s278] sm:$0xff] %v963
      %966 = vst [vmem:[%s278 + $0x8] sm:$0xff] %v964
      %p967 = scmp.lt.s32.totalorder %s18, 1
      %s968 = scalar_select %p967, %s18, 1
      %s969 = smul.addr %s968, 2
      %s970 = smul.addr %s969, 8
      %s971 = scalar_lea.vmem %s7, %s970
      // Predicated region
      $region49: #{forward.1} parent=47 // pred_check
        %p972 = pneg %p188
      $region50: #{forward.1} parent=47 // pred_check_branch
        %974 = sbr.rel (%p972) target = $region52
      $region51: #{forward.1} parent=47 // pred_region
        _
      $region52: #{forward.1} parent=47 // pred_fallthru
        _
    $region48: #{forward.1} parent=5 // pred_fallthru
      _
    %p975 = scmp.le.s32.totalorder 2, %s13
    // Predicated region
    $region53: #{forward.1} parent=5 // pred_check
      %p976 = pneg %p975
    $region54: #{forward.1} parent=5 // pred_check_branch
      %978 = sbr.rel (%p976) target = $region56
    $region55: #{forward.1} parent=5 // pred_region
      %s979 = ssub.s32 %s13, 2
      // Predicated region
      $region57: #{forward.1} parent=55 // pred_check
        %p980 = pneg %p194
      $region58: #{forward.1} parent=55 // pred_check_branch
        %982 = sbr.rel (%p980) target = $region60
      $region59: #{forward.1} parent=55 // pred_region
        %p983 = scmp.lt.s32.totalorder %s19, 1
        %s984 = scalar_select %p983, %s19, 1
        %s985 = smul.addr %s984, 2
        %s986 = smul.addr %s985, 8
        %s987 = scalar_lea.vmem %s7, %s986
      $region60: #{forward.1} parent=55 // pred_fallthru
        _
    $region56: #{forward.1} parent=5 // pred_fallthru
      _
  $region6: #{forward.1} parent=0 // loop_footer
    %s17 = sadd.s32 1, %s13
  $region7: #{forward.1} parent=0 // loop_footer_branch
    %12 = sbr.rel target = $region3
  $region8: #{forward.1} parent=0 // loop_exit
    _

</llo_original>
